<compile_context>
chip_gen: v5e
topology: v5e:2x2
jax: 0.10.0
libtpu: 0.0.40
codegen_flags: <defaults>
</compile_context>

<pallas_src>
import functools

import jax
import jax.numpy as jnp
from jax.experimental import pallas as pl
from jax.experimental.pallas import tpu as pltpu


def _largest_block(total, quantum, max_blk):
    """Largest divisor of `total` that is a multiple of `quantum` and <= max_blk;
    falls back to `total` (a full dim is always a legal block)."""
    best = None
    d = quantum
    while d <= min(total, max_blk):
        if total % d == 0:
            best = d
        d += quantum
    return best if best is not None else total


# ---------------------------------------------------------------------------
# Pointwise (1x1) conv + bias: y[b, :, n] = W @ x[b, :, n] + b     (MXU matmul)
# Layout (B, C, N) so the flat-spatial axis N sits in lanes (lane-dense).
# ---------------------------------------------------------------------------
def _pointwise_kernel(x_ref, w_ref, b_ref, o_ref):
    # x_ref: (1, Cin, n_blk) ; w_ref: (Cout, Cin) ; b_ref: (Cout, 1)
    o_ref[0] = (jnp.dot(w_ref[...], x_ref[0],
                        preferred_element_type=jnp.float32) + b_ref[...])


def pointwise_conv(x, w, b, *, n_blk=None):
    """x: (B, Cin, N) f32 ; w: (Cout, Cin) ; b: (Cout,)  ->  (B, Cout, N)."""
    B, Cin, N = x.shape
    Cout = w.shape[0]
    if n_blk is None:
        n_blk = _largest_block(N, 128, 4096)
    return pl.pallas_call(
        _pointwise_kernel,
        out_shape=jax.ShapeDtypeStruct((B, Cout, N), jnp.float32),
        grid_spec=pltpu.PrefetchScalarGridSpec(
            num_scalar_prefetch=0,
            grid=(B, N // n_blk),
            in_specs=[pl.BlockSpec((1, Cin, n_blk), lambda bi, ni: (bi, 0, ni)),
                      pl.BlockSpec((Cout, Cin), lambda bi, ni: (0, 0)),
                      pl.BlockSpec((Cout, 1), lambda bi, ni: (0, 0))],
            out_specs=pl.BlockSpec((1, Cout, n_blk), lambda bi, ni: (bi, 0, ni)),
        ),
        compiler_params=pltpu.CompilerParams(
            dimension_semantics=("parallel", "parallel")),
        cost_estimate=pl.CostEstimate(
            flops=2 * B * Cout * Cin * N, transcendentals=0,
            bytes_accessed=4 * (B * Cin * N + Cout * Cin + Cout + B * Cout * N)),
    )(x, w.astype(jnp.float32), b.astype(jnp.float32).reshape(Cout, 1))


# ---------------------------------------------------------------------------
# GroupNorm (optionally fused with GELU).  One grid step per (batch, group);
# the (gc, N) group slab lives entirely in VMEM (<= a few MiB at U-Net scales).
# ---------------------------------------------------------------------------
def _groupnorm_kernel(x_ref, g_ref, b_ref, o_ref, *, eps, gelu):
    # x_ref: (1, 1, gc, N) ; g_ref/b_ref: (1, gc, 1) ; o_ref: (1, 1, gc, N)
    x = x_ref[0, 0]                                          # (gc, N)
    mu = jnp.mean(x, axis=(0, 1), keepdims=True)             # (1, 1)
    var = jnp.mean(jnp.square(x - mu), axis=(0, 1), keepdims=True)
    y = (x - mu) * jax.lax.rsqrt(var + eps)
    y = y * g_ref[0] + b_ref[0]                               # per-channel affine
    if gelu:
        y = jax.nn.gelu(y, approximate=True)
    o_ref[0, 0] = y


def group_norm(x, gamma, beta, num_groups, *, eps=1e-5, gelu=False):
    """x: (B, C, N) f32, stats over (C//G, N) per (batch, group) like torch."""
    B, C, N = x.shape
    gc = C // num_groups
    xg = x.reshape(B, num_groups, gc, N)
    out = pl.pallas_call(
        functools.partial(_groupnorm_kernel, eps=eps, gelu=gelu),
        out_shape=jax.ShapeDtypeStruct((B, num_groups, gc, N), jnp.float32),
        grid_spec=pltpu.PrefetchScalarGridSpec(
            num_scalar_prefetch=0,
            grid=(B, num_groups),
            in_specs=[pl.BlockSpec((1, 1, gc, N), lambda bi, g: (bi, g, 0, 0)),
                      pl.BlockSpec((1, gc, 1), lambda bi, g: (g, 0, 0)),
                      pl.BlockSpec((1, gc, 1), lambda bi, g: (g, 0, 0))],
            out_specs=pl.BlockSpec((1, 1, gc, N), lambda bi, g: (bi, g, 0, 0)),
        ),
        compiler_params=pltpu.CompilerParams(
            dimension_semantics=("parallel", "parallel")),
        cost_estimate=pl.CostEstimate(
            flops=10 * B * C * N,
            transcendentals=(B * C * N if gelu else 0),
            bytes_accessed=4 * (2 * B * C * N + 2 * C)),
    )(xg,
      gamma.astype(jnp.float32).reshape(num_groups, gc, 1),
      beta.astype(jnp.float32).reshape(num_groups, gc, 1))
    return out.reshape(B, C, N)


# ---------------------------------------------------------------------------
# DWConv: grouped 3x3 conv (groups = C // 4, 4 in -> 4 out channels per group,
# padding=1, bias).  One grid step per (batch, group): 48 sublane band loads,
# 144 scalar-broadcast MACs on the VPU; the 3x3 taps and biases are tiny and
# read as SMEM scalars.  Zero halo is built once in the wrapper.
# ---------------------------------------------------------------------------
def _dwconv3x3_kernel(x_ref, w_sref, b_sref, o_ref):
    # x_ref: (1, 1, gc, Hp, Wp) VMEM ; w_sref: (G, gc*gc*9) SMEM
    # b_sref: (G, gc) SMEM        ; o_ref: (1, 1, gc, H, W)
    g = pl.program_id(1)
    gc = o_ref.shape[2]
    H = o_ref.shape[3]
    W = o_ref.shape[4]
    for co in range(gc):
        acc = jnp.zeros((H, W), jnp.float32)
        for ci in range(gc):
            for dy in range(3):
                band = x_ref[0, 0, ci, dy:dy + H, :]          # (H, W + 2)
                for dx in range(3):
                    wv = w_sref[g, ((co * gc + ci) * 3 + dy) * 3 + dx]
                    acc = acc + wv * band[:, dx:dx + W]
        o_ref[0, 0, co] = acc + b_sref[g, co]


def dwconv3x3(x, w, b):
    """x: (B, C, H, W) ; w: (C, 4, 3, 3) torch-layout grouped weights ; b: (C,)."""
    B, C, H, W = x.shape
    gc = 4
    G = C // gc
    Hp, Wp = H + 2, W + 2
    xp = jnp.pad(x.reshape(B, G, gc, H, W),
                 ((0, 0), (0, 0), (0, 0), (1, 1), (1, 1)))     # zero halo, once
    w_flat = w.astype(jnp.float32).reshape(G, gc * gc * 9)     # group-major taps
    b2 = b.astype(jnp.float32).reshape(G, gc)
    out = pl.pallas_call(
        _dwconv3x3_kernel,
        out_shape=jax.ShapeDtypeStruct((B, G, gc, H, W), jnp.float32),
        grid_spec=pltpu.PrefetchScalarGridSpec(
            num_scalar_prefetch=0,
            grid=(B, G),
            in_specs=[
                pl.BlockSpec((1, 1, gc, Hp, Wp), lambda bi, g: (bi, g, 0, 0, 0)),
                pl.BlockSpec(memory_space=pltpu.MemorySpace.SMEM),
                pl.BlockSpec(memory_space=pltpu.MemorySpace.SMEM),
            ],
            out_specs=pl.BlockSpec((1, 1, gc, H, W),
                                   lambda bi, g: (bi, g, 0, 0, 0)),
        ),
        compiler_params=pltpu.CompilerParams(
            dimension_semantics=("parallel", "parallel")),
        cost_estimate=pl.CostEstimate(
            flops=2 * B * C * gc * 9 * H * W, transcendentals=0,
            bytes_accessed=4 * (B * C * (Hp * Wp + H * W) + C * gc * 9 + C)),
    )(xp, w_flat, b2)
    return out.reshape(B, C, H, W)


# ---------------------------------------------------------------------------
# Mlp wrapper: fc1 -> gn1 -> dwconv -> gn2 -> GELU -> fc2 -> gn3  (drop = 0)
# ---------------------------------------------------------------------------
def mlp_forward(x_tokens, p, H, W, *, n_blk=None):
    """x_tokens: (B, N, Cin) with N = H*W  ->  (B, N, Cout)."""
    B, N, Cin = x_tokens.shape
    Ch = p["w1"].shape[0]
    Cout = p["w2"].shape[0]
    xc = jnp.transpose(x_tokens, (0, 2, 1))                    # (B, Cin, N)
    h = pointwise_conv(xc, p["w1"], p["b1"], n_blk=n_blk)
    h = group_norm(h, p["gn1_w"], p["gn1_b"], Ch // 4)
    h = dwconv3x3(h.reshape(B, Ch, H, W), p["wd"], p["bd"]).reshape(B, Ch, N)
    h = group_norm(h, p["gn2_w"], p["gn2_b"], Ch // 4, gelu=True)
    o = pointwise_conv(h, p["w2"], p["b2"], n_blk=n_blk)
    o = group_norm(o, p["gn3_w"], p["gn3_b"], Cout // 4)
    return jnp.transpose(o, (0, 2, 1))


# ---------------------------------------------------------------------------
# PatchMerging: space-to-depth (wrapper) + fused LayerNorm + Linear kernel.
# ---------------------------------------------------------------------------
def _ln_linear_kernel(x_ref, g_ref, b_ref, w_ref, o_ref, *, eps):
    # x_ref: (1, n_blk, C4) ; g_ref/b_ref: (1, C4) ; w_ref: (C4, Cout)
    x = x_ref[0]
    mu = jnp.mean(x, axis=-1, keepdims=True)
    var = jnp.mean(jnp.square(x - mu), axis=-1, keepdims=True)
    xn = (x - mu) * jax.lax.rsqrt(var + eps)
    xn = xn * g_ref[...] + b_ref[...]
    o_ref[0] = jnp.dot(xn, w_ref[...], preferred_element_type=jnp.float32)


def patch_merging(x, ln_w, ln_b, w_red, *, n_blk=None, eps=1e-5):
    """x: (B, C, H, W) ; w_red: (Cout, 4C) torch Linear weight  -> (B, Cout, H/2, W/2)."""
    B, C, H, W = x.shape
    C4 = 4 * C
    Cout = w_red.shape[0]
    N4 = (H // 2) * (W // 2)
    # TODO(synk): the 2x2 space-to-depth gather below is layout plumbing left to XLA.
    xp = jnp.transpose(x, (0, 2, 3, 1))
    t = jnp.concatenate([xp[:, 0::2, 0::2, :], xp[:, 1::2, 0::2, :],
                         xp[:, 0::2, 1::2, :], xp[:, 1::2, 1::2, :]], axis=-1)
    t = t.reshape(B, N4, C4).astype(jnp.float32)
    if n_blk is None:
        n_blk = _largest_block(N4, 8, 1024)
    out = pl.pallas_call(
        functools.partial(_ln_linear_kernel, eps=eps),
        out_shape=jax.ShapeDtypeStruct((B, N4, Cout), jnp.float32),
        grid_spec=pltpu.PrefetchScalarGridSpec(
            num_scalar_prefetch=0,
            grid=(B, N4 // n_blk),
            in_specs=[pl.BlockSpec((1, n_blk, C4), lambda bi, ni: (bi, ni, 0)),
                      pl.BlockSpec((1, C4), lambda bi, ni: (0, 0)),
                      pl.BlockSpec((1, C4), lambda bi, ni: (0, 0)),
                      pl.BlockSpec((C4, Cout), lambda bi, ni: (0, 0))],
            out_specs=pl.BlockSpec((1, n_blk, Cout), lambda bi, ni: (bi, ni, 0)),
        ),
        compiler_params=pltpu.CompilerParams(
            dimension_semantics=("parallel", "parallel")),
        cost_estimate=pl.CostEstimate(
            flops=2 * B * N4 * C4 * Cout + 8 * B * N4 * C4, transcendentals=0,
            bytes_accessed=4 * (B * N4 * (C4 + Cout) + C4 * (Cout + 2))),
    )(t,
      ln_w.astype(jnp.float32).reshape(1, C4),
      ln_b.astype(jnp.float32).reshape(1, C4),
      jnp.transpose(w_red.astype(jnp.float32)))
    out = out.reshape(B, H // 2, W // 2, Cout)
    return jnp.transpose(out, (0, 3, 1, 2))


# ---------------------------------------------------------------------------
# Pure-JAX references (match the PyTorch forward; exact-erf GELU replaced by
# the tanh approximation to mirror the kernels).
# ---------------------------------------------------------------------------
def mlp_reference(x_tokens, p, H, W):
    B, N, Cin = x_tokens.shape
    Ch = p["w1"].shape[0]
    Cout = p["w2"].shape[0]
    hi = jax.lax.Precision.HIGHEST
    x = jnp.transpose(x_tokens, (0, 2, 1)).reshape(B, Cin, H, W)

    def conv1x1(v, w, b):
        return jnp.einsum("oc,bchw->bohw", w, v, precision=hi) + b[None, :, None, None]

    def gn(v, w, b, groups, eps=1e-5):
        B_, C_, H_, W_ = v.shape
        vg = v.reshape(B_, groups, C_ // groups, H_, W_)
        mu = jnp.mean(vg, axis=(2, 3, 4), keepdims=True)
        var = jnp.mean(jnp.square(vg - mu), axis=(2, 3, 4), keepdims=True)
        vn = ((vg - mu) * jax.lax.rsqrt(var + eps)).reshape(B_, C_, H_, W_)
        return vn * w[None, :, None, None] + b[None, :, None, None]

    h = gn(conv1x1(x, p["w1"], p["b1"]), p["gn1_w"], p["gn1_b"], Ch // 4)
    h = jax.lax.conv_general_dilated(
        h, p["wd"], (1, 1), ((1, 1), (1, 1)),
        dimension_numbers=("NCHW", "OIHW", "NCHW"),
        feature_group_count=Ch // 4, precision=hi) + p["bd"][None, :, None, None]
    h = jax.nn.gelu(gn(h, p["gn2_w"], p["gn2_b"], Ch // 4), approximate=True)
    o = gn(conv1x1(h, p["w2"], p["b2"]), p["gn3_w"], p["gn3_b"], Cout // 4)
    return jnp.transpose(o.reshape(B, Cout, N), (0, 2, 1))


def patch_merging_reference(x, ln_w, ln_b, w_red, eps=1e-5):
    B, C, H, W = x.shape
    xp = jnp.transpose(x, (0, 2, 3, 1))
    t = jnp.concatenate([xp[:, 0::2, 0::2, :], xp[:, 1::2, 0::2, :],
                         xp[:, 0::2, 1::2, :], xp[:, 1::2, 1::2, :]], axis=-1)
    t = t.reshape(B, -1, 4 * C)
    mu = jnp.mean(t, axis=-1, keepdims=True)
    var = jnp.mean(jnp.square(t - mu), axis=-1, keepdims=True)
    tn = (t - mu) * jax.lax.rsqrt(var + eps) * ln_w + ln_b
    out = jnp.einsum("bnc,oc->bno", tn, w_red, precision=jax.lax.Precision.HIGHEST)
    out = out.reshape(B, H // 2, W // 2, -1)
    return jnp.transpose(out, (0, 3, 1, 2))


if __name__ == "__main__":
    k = jax.random.split(jax.random.PRNGKey(0), 16)

    # Small shapes consistent with the module: tokens (B, N, C) with N = H*W,
    # hidden = dim * mlp_ratio(=0.25), GroupNorm groups of 4 channels.
    B, dim, H, W = 2, 32, 16, 16
    N = H * W
    hidden = dim // 4
    dim_out = dim

    x_tokens = jax.random.normal(k[0], (B, N, dim), jnp.float32)

    p = dict(
        w1=0.2 * jax.random.normal(k[1], (hidden, dim), jnp.float32),
        b1=0.1 * jax.random.normal(k[2], (hidden,), jnp.float32),
        gn1_w=1.0 + 0.1 * jax.random.normal(k[3], (hidden,), jnp.float32),
        gn1_b=0.1 * jax.random.normal(k[4], (hidden,), jnp.float32),
        wd=0.2 * jax.random.normal(k[5], (hidden, 4, 3, 3), jnp.float32),
        bd=0.1 * jax.random.normal(k[6], (hidden,), jnp.float32),
        gn2_w=1.0 + 0.1 * jax.random.normal(k[7], (hidden,), jnp.float32),
        gn2_b=0.1 * jax.random.normal(k[8], (hidden,), jnp.float32),
        w2=0.2 * jax.random.normal(k[9], (dim_out, hidden), jnp.float32),
        b2=0.1 * jax.random.normal(k[10], (dim_out,), jnp.float32),
        gn3_w=1.0 + 0.1 * jax.random.normal(k[11], (dim_out,), jnp.float32),
        gn3_b=0.1 * jax.random.normal(k[12], (dim_out,), jnp.float32),
    )

    # ---- Mlp ---------------------------------------------------------------
    out = mlp_forward(x_tokens, p, H, W, n_blk=128)   # n_blk=128 -> multi-step grid
    out = jax.block_until_ready(out)
    ref = mlp_reference(x_tokens, p, H, W)
    assert out.shape == (B, N, dim_out), out.shape
    # Loose tolerance covers MXU-vs-XLA f32 matmul pass differences; real
    # layout/semantic bugs produce O(1) errors.
    err1 = float(jnp.max(jnp.abs(out - ref)))
    assert err1 < 5e-2, err1

    # ---- PatchMerging on the Mlp output arranged as (B, C, H, W) ------------
    x_img = jnp.transpose(out, (0, 2, 1)).reshape(B, dim_out, H, W)
    ln_w = 1.0 + 0.1 * jax.random.normal(k[13], (4 * dim_out,), jnp.float32)
    ln_b = 0.1 * jax.random.normal(k[14], (4 * dim_out,), jnp.float32)
    w_red = 0.2 * jax.random.normal(k[15], (2 * dim_out, 4 * dim_out), jnp.float32)

    pm = patch_merging(x_img, ln_w, ln_b, w_red)
    pm = jax.block_until_ready(pm)
    pm_ref = patch_merging_reference(x_img, ln_w, ln_b, w_red)
    assert pm.shape == (B, 2 * dim_out, H // 2, W // 2), pm.shape
    err2 = float(jnp.max(jnp.abs(pm - pm_ref)))
    assert err2 < 5e-2, err2

    print("KERNEL_OK")
</pallas_src>

<mosaic_0001>
module attributes {stable_mosaic.version = 11 : i64} {
  func.func @_pointwise_kernel(%arg0: i32, %arg1: i32, %arg2: memref<1x32x128xf32, #tpu.memory_space<vmem>>, %arg3: memref<8x32xf32, #tpu.memory_space<vmem>>, %arg4: memref<8x1xf32, #tpu.memory_space<vmem>>, %arg5: memref<1x8x128xf32, #tpu.memory_space<vmem>>) attributes {dimension_semantics = [#tpu.dimension_semantics<parallel>, #tpu.dimension_semantics<parallel>], iteration_bounds = array<i64: 2, 2>, scalar_prefetch = 0 : i64, scratch_operands = 0 : i64, tpu.core_type = #tpu.core_type<tc>, window_params = [{transform_indices = @transform_0, window_bounds = array<i64: 1, 32, 128>}, {pipeline_mode = #tpu.pipeline_mode<synchronous>, transform_indices = @transform_1, window_bounds = array<i64: 8, 32>}, {pipeline_mode = #tpu.pipeline_mode<synchronous>, transform_indices = @transform_2, window_bounds = array<i64: 8, 1>}, {transform_indices = @transform_3, window_bounds = array<i64: 1, 8, 128>}]} {
    %c0 = arith.constant 0 : index
    %c0_0 = arith.constant 0 : index
    %0 = vector.load %arg3[%c0, %c0_0] : memref<8x32xf32, #tpu.memory_space<vmem>>, vector<8x32xf32>
    %c0_1 = arith.constant 0 : index
    %c0_2 = arith.constant 0 : index
    %c0_3 = arith.constant 0 : index
    %1 = vector.load %arg2[%c0_1, %c0_2, %c0_3] : memref<1x32x128xf32, #tpu.memory_space<vmem>>, vector<1x32x128xf32>
    %2 = vector.shape_cast %1 : vector<1x32x128xf32> to vector<32x128xf32>
    %cst = arith.constant dense<0.000000e+00> : vector<8x128xf32>
    %3 = tpu.matmul %0, %2, %cst {dimension_numbers = #tpu.dot_dimension_numbers<[1], [0], [0], [1], [0, 0, 1, 1], [], []>} : vector<8x32xf32>, vector<32x128xf32>, vector<8x128xf32> -> vector<8x128xf32>
    %c0_4 = arith.constant 0 : index
    %c0_5 = arith.constant 0 : index
    %4 = vector.load %arg4[%c0_4, %c0_5] : memref<8x1xf32, #tpu.memory_space<vmem>>, vector<8x1xf32>
    %5 = vector.broadcast %4 : vector<8x1xf32> to vector<8x128xf32>
    %6 = arith.addf %3, %5 : vector<8x128xf32>
    %c0_6 = arith.constant 0 : index
    %c0_7 = arith.constant 0 : index
    %c0_8 = arith.constant 0 : index
    %7 = vector.load %arg5[%c0_6, %c0_7, %c0_8] : memref<1x8x128xf32, #tpu.memory_space<vmem>>, vector<1x8x128xf32>
    %8 = vector.shape_cast %7 : vector<1x8x128xf32> to vector<8x128xf32>
    %9 = vector.shape_cast %6 : vector<8x128xf32> to vector<1x8x128xf32>
    tpu.vector_store %arg5[%c0_6, %c0_7, %c0_8], %9 {strides = array<i32>} : memref<1x8x128xf32, #tpu.memory_space<vmem>>, vector<1x8x128xf32>,
    return
  }
  func.func @transform_0(%arg0: i32, %arg1: i32) -> (i32, i32, i32) {
    %c0_i32 = arith.constant 0 : i32
    %c0_i32_0 = arith.constant 0 : i32
    return %arg0, %c0_i32, %arg1 : i32, i32, i32
  }
  func.func @transform_1(%arg0: i32, %arg1: i32) -> (i32, i32) {
    %c0_i32 = arith.constant 0 : i32
    %c0_i32_0 = arith.constant 0 : i32
    %c0_i32_1 = arith.constant 0 : i32
    return %c0_i32, %c0_i32_0 : i32, i32
  }
  func.func @transform_2(%arg0: i32, %arg1: i32) -> (i32, i32) {
    %c0_i32 = arith.constant 0 : i32
    %c0_i32_0 = arith.constant 0 : i32
    %c0_i32_1 = arith.constant 0 : i32
    return %c0_i32, %c0_i32_0 : i32, i32
  }
  func.func @transform_3(%arg0: i32, %arg1: i32) -> (i32, i32, i32) {
    %c0_i32 = arith.constant 0 : i32
    %c0_i32_0 = arith.constant 0 : i32
    return %arg0, %c0_i32, %arg1 : i32, i32, i32
  }
}

</mosaic_0001>

<llo_original>
// kernel: tpu_custom_call.1
$region0: #{tpu_custom_call.1}
  #allocation0 [shape = 'u32[]', space=smem, size = 0x4, offset = 0x4, fixed_abs, tag = 'smem constant byte address 0x4 - core index']
  #allocation1 [shape = 'u32[72,128]{1,0:T(1,128)}', space=vmem, size = 0x9000, scoped, tag = 'internal scratch']
  %s0 = inlined_call_operand.hbm [shape: f32[2,32,256], index: 0, kind: input, shape index: {}]
  %s1 = inlined_call_operand.vmem [shape: f32[8,32], index: 1, kind: input, shape index: {}]
  %s2 = inlined_call_operand.vmem [shape: f32[8,1], index: 2, kind: input, shape index: {}]
  %s3 = inlined_call_operand.hbm [shape: f32[2,8,256], index: 3, kind: output, shape index: {}]
  %s4 = sld [smem:[#allocation0]]
  $region49: #{tpu_custom_call.1} parent=0
    _
  %s6 = ssub.s32 1, %s4
  %s7 = scalar_select 0, %s6, %s4
  $region1: #{tpu_custom_call.1} parent=0
    #allocation2 [shape = 'u8[32768]{0}', space=vmem, size = 0x8000, scoped, tag = 'input window, operand 0']
    #allocation3 [shape = 's32[2]{0}', space=sflag, size = 0x8, scoped, tag = 'scoped memory for tpu_custom_call.1']
    #allocation4 [shape = 's32[2]{0}', space=sflag, size = 0x8, scoped, tag = 'scoped memory for tpu_custom_call.1']
    #allocation5 [shape = 'u8[8192]{0}', space=vmem, size = 0x2000, scoped, tag = 'output window, operand 0']
    %8 = vsyncpa [#allocation3], 0
    %s9 = scalar_lea.sflag [#allocation3], 1
    %10 = vsyncpa %s9, 0
    %11 = vsyncpa [#allocation4], 0
    %s12 = scalar_lea.sflag [#allocation4], 1
    %13 = vsyncpa %s12, 0
    loop: start=0, step=1, limit=6
    $region2: #{tpu_custom_call.1} parent=1 // loop_pre_header
      _
    $region3: #{tpu_custom_call.1} parent=1 // loop_header
      %s15 = sphi 0, %s19
      %p16 = scmp.ge.s32.totalorder %s15, 6
      %s22 = sphi 0, %s34
      %s23 = sphi 0, %s30
      %s24 = sphi 0, %s22
      %s25 = sphi 0, %s23
      %s26 = sphi 0, %s24
      %s27 = sphi 0, %s25
      %s39 = sphi 0, %s41
      %s42 = sphi 0, %s39
      %s43 = sphi 0, %s42
      %s59 = sphi 0, %s43
      %s63 = sphi 0, %s63
      %s65 = sphi 0, %s63
      %s66 = sphi 0, %s65
      %s80 = sphi 0, %s66
      %s84 = sphi 0, %s84
      %s86 = sphi 0, %s84
      %s87 = sphi 0, %s86
      %s101 = sphi 0, %s87
      %s109 = sphi 0, %s111
      %s112 = sphi 0, %s109
      %s113 = sphi 0, %s112
      %s129 = sphi 0, %s113
    $region4: #{tpu_custom_call.1} parent=1 // loop_header_branch
      %18 = sbr.rel (%p16) target = $region8
    $region5: #{tpu_custom_call.1} parent=1 // loop_body
      %s20 = ssub.s32 %s15, 1
      %s21 = ssub.s32 %s15, 2
      %s28 = sadd.s32 1, %s23
      %p29 = scmp.ge.s32.totalorder %s28, 2
      %s30 = scalar_select %p29, 0, %s28
      %s31 = sadd.s32 1, %s22
      %s32 = scalar_select %p29, %s31, %s22
      %p33 = scmp.ge.s32.totalorder %s32, 2
      %s34 = scalar_select %p33, 0, %s32
      %s35 = ssub.s32 %s22, %s34
      %s36 = ssub.s32 %s23, %s30
      %s37 = sor.u32 %s35, %s36
      %p38 = scmp.eq.s32.totalorder %s37, 0
      %s40 = sadd.s32 %s39, 1
      %s41 = scalar_select %p38, %s39, %s40
      %p44 = pneg %p38
      %p45 = scmp.eq.s32.totalorder %s15, 3
      %p46 = por %p44, %p45
      %p47 = scmp.ne.s32.totalorder %s39, %s42
      %p48 = scmp.eq.s32.totalorder %s15, 0
      %p49 = por %p47, %p48
      %p50 = scmp.ne.s32.totalorder %s39, %s42
      %p51 = scmp.eq.s32.totalorder %s20, 3
      %p52 = por %p50, %p51
      %p53 = scmp.ne.s32.totalorder %s42, %s43
      %p54 = scmp.eq.s32.totalorder %s20, 0
      %p55 = por %p53, %p54
      %p56 = scmp.ne.s32.totalorder %s42, %s43
      %p57 = scmp.eq.s32.totalorder %s21, 3
      %p58 = por %p56, %p57
      %p60 = scmp.ne.s32.totalorder %s43, %s59
      %p61 = scmp.eq.s32.totalorder %s21, 0
      %p62 = por %p60, %p61
      %s64 = sadd.s32 %s63, 1
      %p67 = scmp.eq.s32.totalorder %s15, 3
      %p68 = scmp.ne.s32.totalorder %s63, %s65
      %p69 = scmp.eq.s32.totalorder %s15, 0
      %p70 = por %p68, %p69
      %p71 = scmp.ne.s32.totalorder %s63, %s65
      %p72 = scmp.eq.s32.totalorder %s20, 3
      %p73 = por %p71, %p72
      %p74 = scmp.ne.s32.totalorder %s65, %s66
      %p75 = scmp.eq.s32.totalorder %s20, 0
      %p76 = por %p74, %p75
      %p77 = scmp.ne.s32.totalorder %s65, %s66
      %p78 = scmp.eq.s32.totalorder %s21, 3
      %p79 = por %p77, %p78
      %p81 = scmp.ne.s32.totalorder %s66, %s80
      %p82 = scmp.eq.s32.totalorder %s21, 0
      %p83 = por %p81, %p82
      %s85 = sadd.s32 %s84, 1
      %p88 = scmp.eq.s32.totalorder %s15, 3
      %p89 = scmp.ne.s32.totalorder %s84, %s86
      %p90 = scmp.eq.s32.totalorder %s15, 0
      %p91 = por %p89, %p90
      %p92 = scmp.ne.s32.totalorder %s84, %s86
      %p93 = scmp.eq.s32.totalorder %s20, 3
      %p94 = por %p92, %p93
      %p95 = scmp.ne.s32.totalorder %s86, %s87
      %p96 = scmp.eq.s32.totalorder %s20, 0
      %p97 = por %p95, %p96
      %p98 = scmp.ne.s32.totalorder %s86, %s87
      %p99 = scmp.eq.s32.totalorder %s21, 3
      %p100 = por %p98, %p99
      %p102 = scmp.ne.s32.totalorder %s87, %s101
      %p103 = scmp.eq.s32.totalorder %s21, 0
      %p104 = por %p102, %p103
      %s105 = ssub.s32 %s22, %s34
      %s106 = ssub.s32 %s23, %s30
      %s107 = sor.u32 %s105, %s106
      %p108 = scmp.eq.s32.totalorder %s107, 0
      %s110 = sadd.s32 %s109, 1
      %s111 = scalar_select %p108, %s109, %s110
      %p114 = pneg %p108
      %p115 = scmp.eq.s32.totalorder %s15, 3
      %p116 = por %p114, %p115
      %p117 = scmp.ne.s32.totalorder %s109, %s112
      %p118 = scmp.eq.s32.totalorder %s15, 0
      %p119 = por %p117, %p118
      %p120 = scmp.ne.s32.totalorder %s109, %s112
      %p121 = scmp.eq.s32.totalorder %s20, 3
      %p122 = por %p120, %p121
      %p123 = scmp.ne.s32.totalorder %s112, %s113
      %p124 = scmp.eq.s32.totalorder %s20, 0
      %p125 = por %p123, %p124
      %p126 = scmp.ne.s32.totalorder %s112, %s113
      %p127 = scmp.eq.s32.totalorder %s21, 3
      %p128 = por %p126, %p127
      %p130 = scmp.ne.s32.totalorder %s113, %s129
      %p131 = scmp.eq.s32.totalorder %s21, 0
      %p132 = por %p130, %p131
      %p133 = scmp.le.s32.totalorder 1, %s15
      %p134 = scmp.lt.s32.totalorder %s15, 5
      %p135 = pnand %p133, %p134
      %p136 = pneg %p135
      // Predicated region
      $region9: #{tpu_custom_call.1} parent=5 // pred_check
        _
      $region10: #{tpu_custom_call.1} parent=5 // pred_check_branch
        %138 = sbr.rel (%p135) target = $region12
      $region11: #{tpu_custom_call.1} parent=5 // pred_region
        %s139 = ssub.s32 %s15, 1
        // Predicated region
        $region13: #{tpu_custom_call.1} parent=11 // pred_check
          %p140 = pneg %p76
        $region14: #{tpu_custom_call.1} parent=11 // pred_check_branch
          %142 = sbr.rel (%p140) target = $region16
        $region15: #{tpu_custom_call.1} parent=11 // pred_region
          _
        $region16: #{tpu_custom_call.1} parent=11 // pred_fallthru
          _
        // Predicated region
        $region17: #{tpu_custom_call.1} parent=11 // pred_check
          %p143 = pneg %p97
        $region18: #{tpu_custom_call.1} parent=11 // pred_check_branch
          %145 = sbr.rel (%p143) target = $region20
        $region19: #{tpu_custom_call.1} parent=11 // pred_region
          _
        $region20: #{tpu_custom_call.1} parent=11 // pred_fallthru
          _
      $region12: #{tpu_custom_call.1} parent=5 // pred_fallthru
        _
      %p146 = scmp.lt.s32.totalorder %s15, 4
      // Predicated region
      $region21: #{tpu_custom_call.1} parent=5 // pred_check
        %p147 = pneg %p146
      $region22: #{tpu_custom_call.1} parent=5 // pred_check_branch
        %149 = sbr.rel (%p147) target = $region24
      $region23: #{tpu_custom_call.1} parent=5 // pred_region
        // Predicated region
        $region25: #{tpu_custom_call.1} parent=23 // pred_check
          %p150 = pneg %p49
        $region26: #{tpu_custom_call.1} parent=23 // pred_check_branch
          %152 = sbr.rel (%p150) target = $region28
        $region27: #{tpu_custom_call.1} parent=23 // pred_region
          %s153 = sand.u32 %s39, 1
          %s154 = scalar_lea.sflag [#allocation3], %s153
          %s155 = sand.u32 %s39, 1
          %s156 = smul.addr %s155, 32
          %s157 = scalar_lea.vmem [#allocation2], %s156
          %159 = vsyncadd %s154, 0
          %s160 = smul.addr %s22, 8
          %s161 = sadd.s32 %s23, %s160
          %s162 = smul.addr %s161, 8
          %s163 = scalar_lea.hbm %s0, %s162
          %s164 = sshll.u32 %s163, 4
          %s165 = int_to_ptr.hbm [resolvable:$true] %s164
          %s166 = sshll.u32 %s157, 4
          %s167 = int_to_ptr.vmem [resolvable:$true] %s166
          %172 = dma.hbm_to_vmem [thread:$0]  %s165, 512, %s167, %s154, 256, 128, 8
        $region28: #{tpu_custom_call.1} parent=23 // pred_fallthru
          _
      $region24: #{tpu_custom_call.1} parent=5 // pred_fallthru
        _
      %p173 = scmp.le.s32.totalorder 1, %s15
      %p174 = scmp.lt.s32.totalorder %s15, 5
      %p175 = pnand %p173, %p174
      %p176 = pneg %p175
      // Predicated region
      $region29: #{tpu_custom_call.1} parent=5 // pred_check
        _
      $region30: #{tpu_custom_call.1} parent=5 // pred_check_branch
        %178 = sbr.rel (%p175) target = $region32
      $region31: #{tpu_custom_call.1} parent=5 // pred_region
        %s179 = ssub.s32 %s15, 1
        %s180 = sand.u32 %s42, 1
        %s181 = scalar_lea.sflag [#allocation3], %s180
        %s182 = sand.u32 %s42, 1
        %s183 = smul.addr %s182, 32
        %s184 = scalar_lea.vmem [#allocation2], %s183
        // Predicated region
        $region33: #{tpu_custom_call.1} parent=31 // pred_check
          %p185 = pneg %p55
        $region34: #{tpu_custom_call.1} parent=31 // pred_check_branch
          %187 = sbr.rel (%p185) target = $region36
        $region35: #{tpu_custom_call.1} parent=31 // pred_region
          %189 = dma.done %s181, 512
        $region36: #{tpu_custom_call.1} parent=31 // pred_fallthru
          _
        %s190 = sand.u32 %s42, 1
        %s191 = scalar_lea.sflag [#allocation3], %s190
        %s192 = sand.u32 %s42, 1
        %s193 = smul.addr %s192, 32
        %s194 = scalar_lea.vmem [#allocation2], %s193
        %p195 = pneg %p55
        %p196 = pneg %p52
        %p197 = pneg %p76
        %p198 = pneg %p73
        %p199 = pneg %p97
        %p200 = pneg %p94
        %p201 = pneg %p125
        %p202 = pneg %p122
        %s203 = sand.u32 %s112, 1
        %s204 = scalar_lea.sflag [#allocation4], %s203
        %s205 = sand.u32 %s112, 1
        %s206 = smul.addr %s205, 8
        %s207 = scalar_lea.vmem [#allocation5], %s206
        %v208 = vld [vmem:[%s1] sm:$0xff]
        %v209 = vld [vmem:[%s184] sm:$0xff]
        %v210 = vld [vmem:[%s184 + $0x8] sm:$0xff]
        %v211 = vld [vmem:[%s184 + $0x10] sm:$0xff]
        %v212 = vld [vmem:[%s184 + $0x18] sm:$0xff]
        %v213 = vld [vmem:[%s2] sm:$0xff]
        %215 = vset.pattern.permute.xlu0 0
        %216 = vperm.xlu0 %215, %v213
        %v217 = vpop.permute.xlu0 %216
        %vm219 = vcmask 261120
        %v221 = vsel %vm219, %v208, 0
        %223 = vmatpush.msra.mxu0 0.0
        %224 = vmatpush.msra.mxu0 0.0
        %225 = vmatpush.msra.mxu0 0.0
        %226 = vmatpush.msra.mxu0 0.0
        %227 = vmatpush.msra.mxu0 0.0
        %228 = vmatpush.msra.mxu0 0.0
        %229 = vmatpush.msra.mxu0 0.0
        %230 = vmatpush.msra.mxu0 0.0
        %231 = vmatpush.msra.mxu0 0.0
        %232 = vmatpush.msra.mxu0 0.0
        %233 = vmatpush.msra.mxu0 0.0
        %234 = vmatpush.msra.mxu0 0.0
        %235 = vmatpush.msra.mxu0 %v212
        %236 = vmatpush.msra.mxu0 %v211
        %237 = vmatpush.msra.mxu0 %v210
        %238 = vmatpush.msra.mxu0 %v209
        %239 = vmatmul.f32.gmra.mxu0 %v221
        %v240 = vpop.f32.mrf.mxu0
        %v241 = vadd.f32 %v217, %v240
        %242 = vdwg.mxu0
        %243 = vst [vmem:[%s207] sm:$0xff] %v241
        %s244 = sand.u32 %s112, 1
        %s245 = scalar_lea.sflag [#allocation4], %s244
        %s246 = sand.u32 %s112, 1
        %s247 = smul.addr %s246, 8
        %s248 = scalar_lea.vmem [#allocation5], %s247
        // Predicated region
        $region37: #{tpu_custom_call.1} parent=31 // pred_check
          %p249 = pneg %p122
        $region38: #{tpu_custom_call.1} parent=31 // pred_check_branch
          %251 = sbr.rel (%p249) target = $region40
        $region39: #{tpu_custom_call.1} parent=31 // pred_region
          %253 = vsyncadd %s245, 0
          %s254 = smul.addr %s24, 2
          %s255 = sadd.s32 %s25, %s254
          %s256 = smul.addr %s255, 8
          %s257 = scalar_lea.hbm %s3, %s256
          %s259 = sshll.u32 %s248, 4
          %s260 = int_to_ptr.vmem [resolvable:$true] %s259
          %s261 = sshll.u32 %s257, 4
          %s262 = int_to_ptr.hbm [resolvable:$true] %s261
          %264 = dma.vmem_to_hbm [thread:$0]  %s260, 128, %s262, %s245
        $region40: #{tpu_custom_call.1} parent=31 // pred_fallthru
          _
      $region32: #{tpu_custom_call.1} parent=5 // pred_fallthru
        _
      %p265 = scmp.le.s32.totalorder 2, %s15
      // Predicated region
      $region41: #{tpu_custom_call.1} parent=5 // pred_check
        %p266 = pneg %p265
      $region42: #{tpu_custom_call.1} parent=5 // pred_check_branch
        %268 = sbr.rel (%p266) target = $region44
      $region43: #{tpu_custom_call.1} parent=5 // pred_region
        %s269 = ssub.s32 %s15, 2
        // Predicated region
        $region45: #{tpu_custom_call.1} parent=43 // pred_check
          %p270 = pneg %p128
        $region46: #{tpu_custom_call.1} parent=43 // pred_check_branch
          %272 = sbr.rel (%p270) target = $region48
        $region47: #{tpu_custom_call.1} parent=43 // pred_region
          %s273 = sand.u32 %s113, 1
          %s274 = scalar_lea.sflag [#allocation4], %s273
          %s275 = sand.u32 %s113, 1
          %s276 = smul.addr %s275, 8
          %s277 = scalar_lea.vmem [#allocation5], %s276
          %279 = dma.done %s274, 128
        $region48: #{tpu_custom_call.1} parent=43 // pred_fallthru
          _
      $region44: #{tpu_custom_call.1} parent=5 // pred_fallthru
        _
    $region6: #{tpu_custom_call.1} parent=1 // loop_footer
      %s19 = sadd.s32 1, %s15
    $region7: #{tpu_custom_call.1} parent=1 // loop_footer_branch
      %14 = sbr.rel target = $region3
    $region8: #{tpu_custom_call.1} parent=1 // loop_exit
      _
    %280 = vsyncpa [#allocation3], 1
    %s281 = scalar_lea.sflag [#allocation3], 1
    %282 = vsyncpa %s281, 1
    %283 = vsyncpa [#allocation4], 1
    %s284 = scalar_lea.sflag [#allocation4], 1
    %285 = vsyncpa %s284, 1

</llo_original>
